<compile_context>
chip_gen: v7x
topology: tpu7x:2x2x1
jax: 0.10.0
libtpu: 0.0.40
codegen_flags: <defaults>
</compile_context>

<pallas_src>
import math

import jax
import jax.numpy as jnp
import numpy as np
from jax.experimental import pallas as pl
from jax.experimental.pallas import tpu as pltpu

SEQ_LEN = 8
BATCH = 2
D_MODEL = 32
MAX_LEN = 5000

LANES = 128          # lane width of a vreg; last dim of the flattened slab
MAX_TILE_ROWS = 1024  # 1024*128*4B = 512 KiB/block; budgeted for v7x 32 MiB scoped VMEM


# ----------------------------- Pallas kernel -----------------------------
def _add_kernel(x_ref, pe_ref, o_ref):
    # Lane-dense elementwise add: full-vreg loads/stores, no broadcast, no masking.
    o_ref[...] = x_ref[...] + pe_ref[...]


def positional_encoding_pallas(x, pe_buffer):
    """x: (seq_len, batch, d_model); pe_buffer: (max_len, 1, d_model) registered buffer."""
    S, B, D = x.shape
    assert pe_buffer.shape[1] == 1 and pe_buffer.shape[2] == D and pe_buffer.shape[0] >= S

    # Done once per call outside the kernel (plain XLA, tiny): slice the needed
    # rows, broadcast over batch, match the activation dtype.
    pe_slab = jnp.broadcast_to(pe_buffer[:S], (S, B, D)).astype(x.dtype)

    # Flatten to a lane-dense (rows, 128) slab.
    total = S * B * D
    rows = pl.cdiv(total, LANES)
    if rows <= MAX_TILE_ROWS:
        tile_rows = rows            # single block == full array -> (8,128) rule satisfied
        grid_rows = 1
    else:
        tile_rows = MAX_TILE_ROWS   # multiple of 8 -> valid sublane tiling
        grid_rows = pl.cdiv(rows, tile_rows)
    padded_rows = grid_rows * tile_rows
    pad = padded_rows * LANES - total

    x_flat = x.reshape(-1)
    pe_flat = pe_slab.reshape(-1)
    if pad:
        x_flat = jnp.pad(x_flat, (0, pad))
        pe_flat = jnp.pad(pe_flat, (0, pad))
    x2 = x_flat.reshape(padded_rows, LANES)
    pe2 = pe_flat.reshape(padded_rows, LANES)

    out2 = pl.pallas_call(
        _add_kernel,
        out_shape=jax.ShapeDtypeStruct((padded_rows, LANES), x.dtype),
        grid=(grid_rows,),
        in_specs=[
            pl.BlockSpec((tile_rows, LANES), lambda i: (i, 0)),
            pl.BlockSpec((tile_rows, LANES), lambda i: (i, 0)),
        ],
        out_specs=pl.BlockSpec((tile_rows, LANES), lambda i: (i, 0)),
        # Reuse the (freshly created, safely donatable) flattened x slab as the output.
        input_output_aliases={0: 0},
        compiler_params=pltpu.CompilerParams(dimension_semantics=("parallel",)),
    )(x2, pe2)

    return out2.reshape(-1)[:total].reshape(S, B, D)


# ----------------------------- host-side buffer construction -----------------------------
def build_positional_encoding(max_len, d_model):
    """Mirrors PositionalEncoding.__init__: sin on even dims, cos on odd dims."""
    position = np.arange(max_len, dtype=np.float32)[:, None]
    div_term = np.exp(
        np.arange(0, d_model, 2, dtype=np.float32) * -(math.log(10000.0) / d_model)
    )
    pe = np.zeros((max_len, d_model), np.float32)
    pe[:, 0::2] = np.sin(position * div_term)
    pe[:, 1::2] = np.cos(position * div_term)
    # unsqueeze(0).transpose(0, 1)  ->  (max_len, 1, d_model)
    return jnp.asarray(pe[:, None, :])


# ----------------------------- main -----------------------------
if __name__ == "__main__":
    pe_buffer = build_positional_encoding(MAX_LEN, D_MODEL)

    key = jax.random.PRNGKey(0)
    x = jax.random.normal(key, (SEQ_LEN, BATCH, D_MODEL), dtype=jnp.float32)

    # Pure-JAX reference (computed before the kernel call).
    ref = x + pe_buffer[:SEQ_LEN]

    out = positional_encoding_pallas(x, pe_buffer)
    out = jax.block_until_ready(out)

    if not np.allclose(np.asarray(out), np.asarray(ref), atol=1e-6, rtol=1e-6):
        raise AssertionError("Pallas PositionalEncoding output mismatch vs pure-JAX reference")

    assert out.shape == (SEQ_LEN, BATCH, D_MODEL)
    assert bool(jnp.all(jnp.isfinite(out)))
    print("KERNEL_OK")
</pallas_src>

<mosaic_0001>
module attributes {stable_mosaic.version = 11 : i64} {
  func.func @_add_kernel(%arg0: i32, %arg1: memref<4x128xf32, #tpu.memory_space<vmem>>, %arg2: memref<4x128xf32, #tpu.memory_space<vmem>>, %arg3: memref<4x128xf32, #tpu.memory_space<vmem>>) attributes {dimension_semantics = [#tpu.dimension_semantics<parallel>], iteration_bounds = array<i64: 1>, scalar_prefetch = 0 : i64, scratch_operands = 0 : i64, tpu.core_type = #tpu.core_type<tc>, window_params = [{transform_indices = @transform_0, window_bounds = array<i64: 4, 128>}, {transform_indices = @transform_1, window_bounds = array<i64: 4, 128>}, {transform_indices = @transform_2, window_bounds = array<i64: 4, 128>}]} {
    %c0 = arith.constant 0 : index
    %c0_0 = arith.constant 0 : index
    %0 = vector.load %arg1[%c0, %c0_0] : memref<4x128xf32, #tpu.memory_space<vmem>>, vector<4x128xf32>
    %c0_1 = arith.constant 0 : index
    %c0_2 = arith.constant 0 : index
    %1 = vector.load %arg2[%c0_1, %c0_2] : memref<4x128xf32, #tpu.memory_space<vmem>>, vector<4x128xf32>
    %2 = arith.addf %0, %1 : vector<4x128xf32>
    %c0_3 = arith.constant 0 : index
    %c0_4 = arith.constant 0 : index
    %3 = vector.load %arg3[%c0_3, %c0_4] : memref<4x128xf32, #tpu.memory_space<vmem>>, vector<4x128xf32>
    tpu.vector_store %arg3[%c0_3, %c0_4], %2 {strides = array<i32>} : memref<4x128xf32, #tpu.memory_space<vmem>>, vector<4x128xf32>,
    return
  }
  func.func @transform_0(%arg0: i32) -> (i32, i32) {
    %c0_i32 = arith.constant 0 : i32
    %c0_i32_0 = arith.constant 0 : i32
    return %arg0, %c0_i32 : i32, i32
  }
  func.func @transform_1(%arg0: i32) -> (i32, i32) {
    %c0_i32 = arith.constant 0 : i32
    %c0_i32_0 = arith.constant 0 : i32
    return %arg0, %c0_i32 : i32, i32
  }
  func.func @transform_2(%arg0: i32) -> (i32, i32) {
    %c0_i32 = arith.constant 0 : i32
    %c0_i32_0 = arith.constant 0 : i32
    return %arg0, %c0_i32 : i32, i32
  }
}

</mosaic_0001>

<llo_original>
// kernel: tpu_custom_call.1
$region0: #{tpu_custom_call.1}
  #allocation0 [shape = 'u32[]', space=smem, size = 0x4, offset = 0x4, fixed_abs, tag = 'smem constant byte address 0x4 - core index']
  #allocation1 [shape = 'u32[144,128]{1,0:T(1,128)}', space=vmem, size = 0x12000, scoped, tag = 'internal scratch']
  %s0 = inlined_call_operand.hbm [shape: f32[4,128], index: 0, kind: input, shape index: {}, may-alias: {0,2}]
  %s1 = inlined_call_operand.vmem [shape: f32[4,128], index: 1, kind: input, shape index: {}]
  %s2 = inlined_call_operand.hbm [shape: f32[4,128], index: 2, kind: output, shape index: {}, may-alias: {0,2}]
  %s3 = sld [smem:[#allocation0]]
  $region22: #{tpu_custom_call.1} parent=0
    _
  %s5 = ssub.s32 1, %s3
  %s6 = scalar_select 0, %s5, %s3
  $region1: #{tpu_custom_call.1} parent=0
    #allocation2 [shape = 'u8[2048]{0}', space=vmem, size = 0x800, scoped, tag = 'input window, operand 0, single buffered']
    #allocation3 [shape = 's32[1]{0}', space=sflag, size = 0x4, scoped, tag = 'scoped memory for tpu_custom_call.1']
    #allocation4 [shape = 's32[1]{0}', space=sflag, size = 0x4, scoped, tag = 'scoped memory for tpu_custom_call.1']
    #allocation5 [shape = 'u8[2048]{0}', space=vmem, size = 0x800, scoped, tag = 'output window, operand 0, single buffered']
    %7 = vsyncpa [#allocation3], 0
    %8 = vsyncpa [#allocation4], 0
    // Predicated region
    $region2: #{tpu_custom_call.1} parent=1 // pred_check
      _
    $region3: #{tpu_custom_call.1} parent=1 // pred_check_branch
      %10 = sbr.rel (0) target = $region5
    $region4: #{tpu_custom_call.1} parent=1 // pred_region
      %s12 = ssub.s32 64, 64
      %13 = vsyncadd [#allocation3], %s12
      %s15 = sshll.u32 [#allocation2], 4
      %s16 = int_to_ptr.vmem [resolvable:$true] %s15
      %18 = dma.hbm_to_vmem [thread:$0]  %s0, 64, %s16, [#allocation3]
    $region5: #{tpu_custom_call.1} parent=1 // pred_fallthru
      _
    // Predicated region
    $region6: #{tpu_custom_call.1} parent=1 // pred_check
      _
    $region7: #{tpu_custom_call.1} parent=1 // pred_check_branch
      %20 = sbr.rel (0) target = $region9
    $region8: #{tpu_custom_call.1} parent=1 // pred_region
      _
    $region9: #{tpu_custom_call.1} parent=1 // pred_fallthru
      _
    // Predicated region
    $region10: #{tpu_custom_call.1} parent=1 // pred_check
      _
    $region11: #{tpu_custom_call.1} parent=1 // pred_check_branch
      %22 = sbr.rel (0) target = $region13
    $region12: #{tpu_custom_call.1} parent=1 // pred_region
      %23 = dma.done [#allocation3], 64
    $region13: #{tpu_custom_call.1} parent=1 // pred_fallthru
      _
    %v24 = vld [vmem:[#allocation2] sm:$0xf]
    %v25 = vld [vmem:[%s1] sm:$0xf]
    %v26 = vadd.f32 %v24, %v25
    %27 = vst [vmem:[#allocation5] sm:$0xf] %v26
    // Predicated region
    $region14: #{tpu_custom_call.1} parent=1 // pred_check
      _
    $region15: #{tpu_custom_call.1} parent=1 // pred_check_branch
      %29 = sbr.rel (0) target = $region17
    $region16: #{tpu_custom_call.1} parent=1 // pred_region
      %s31 = ssub.s32 64, 64
      %32 = vsyncadd [#allocation4], %s31
      %s34 = sshll.u32 [#allocation5], 4
      %s35 = int_to_ptr.vmem [resolvable:$true] %s34
      %37 = dma.vmem_to_hbm [thread:$0]  %s35, 64, %s2, [#allocation4]
    $region17: #{tpu_custom_call.1} parent=1 // pred_fallthru
      _
    // Predicated region
    $region18: #{tpu_custom_call.1} parent=1 // pred_check
      _
    $region19: #{tpu_custom_call.1} parent=1 // pred_check_branch
      %39 = sbr.rel (0) target = $region21
    $region20: #{tpu_custom_call.1} parent=1 // pred_region
      %40 = dma.done [#allocation4], 64
    $region21: #{tpu_custom_call.1} parent=1 // pred_fallthru
      _
    %41 = vsyncpa [#allocation3], 1
    %42 = vsyncpa [#allocation4], 1

</llo_original>
